<compile_context>
chip_gen: v6e
topology: v6e:2x2x1
jax: 0.10.0
libtpu: 0.0.40
codegen_flags: <defaults>
</compile_context>

<pallas_src>
import functools

import jax
import jax.numpy as jnp
from jax.experimental import pallas as pl
from jax.experimental.pallas import tpu as pltpu

EPS = 1e-6


def _round_up(x: int, m: int) -> int:
    return ((x + m - 1) // m) * m


def _seesaw_kernel(logits_ref, tgt_ref, srow_ref, out_ref, acc,
                   *, tm, b_true, needs_mask, unit_diag):
    core = pl.program_id(0)
    i = pl.program_id(1)

    @pl.when(i == 0)
    def _init():
        acc[...] = jnp.zeros_like(acc)

    logits = logits_ref[...].astype(jnp.float32)                 # [TM, Cp]
    srow = srow_ref[...].astype(jnp.float32)                     # [TM, Cp] = s[t_b, :]
    tgt_col = tgt_ref[...]                                       # [TM, 1] int32
    c = logits.shape[1]

    col = jax.lax.broadcasted_iota(jnp.int32, (tm, c), 1)
    onehot = (col == tgt_col).astype(jnp.float32)                # [TM, Cp]

    m = jnp.max(logits, axis=-1, keepdims=True)                  # [TM, 1]
    expl = jnp.exp(logits - m)                                   # [TM, Cp]
    expl_t = jnp.sum(onehot * expl, axis=-1, keepdims=True)      # [TM, 1]

    if unit_diag:
        # diag(s) == 1  =>  sum_{j!=t} s[t,j] e^{l_j} + e^{l_t} == sum_j s[t,j] e^{l_j}
        denom_t = jnp.sum(srow * expl, axis=-1, keepdims=True)   # [TM, 1]
    else:
        masked = (1.0 - onehot) * expl
        denom_t = jnp.sum(srow * masked, axis=-1, keepdims=True) + expl_t

    sigma_t = expl_t / (denom_t + EPS)                           # [TM, 1]
    loss_rows = -jnp.log(sigma_t + EPS)                          # [TM, 1]

    if needs_mask:  # trace-time switch: zero out batch-padding rows
        base = (core * pl.num_programs(1) + i) * tm
        row = base + jax.lax.broadcasted_iota(jnp.int32, (tm, 1), 0)
        loss_rows = jnp.where(row < b_true, loss_rows, 0.0)

    acc[...] += jnp.sum(loss_rows, axis=0, keepdims=True)

    @pl.when(i == pl.num_programs(1) - 1)
    def _finalize():
        # Lane-dense (8,128) writeback of the per-core partial sum.
        out_ref[...] = jnp.broadcast_to(acc[...], (8, 128))[None, :, :]


def seesaw_loss_with_logits(logits, targets, s, *, block_rows=128, unit_diag=True):
    """Mean Seesaw loss. logits [B, C], targets [B] int, s [C, C].

    `unit_diag=True` assumes diag(s) == 1 (guaranteed by build_seesaw_s / the
    PyTorch module's construction); set False for arbitrary user-supplied s.
    """
    B, C = logits.shape
    targets_i = targets.astype(jnp.int32)

    # Wrapper-side gather of the target-class s row: one dense XLA gather,
    # fed to the kernel as a pipelined BlockSpec stream.
    s_rows = jnp.take(s, targets_i, axis=0)                      # [B, C]

    # Lane-dense classes: pad C to a multiple of 128.
    c_pad = _round_up(max(C, 1), 128)
    if c_pad != C:
        logits = jnp.pad(logits, ((0, 0), (0, c_pad - C)), constant_values=-1e9)
        s_rows = jnp.pad(s_rows, ((0, 0), (0, c_pad - C)))

    # Tile rows: biggest that fits a conservative per-generation VMEM budget
    # (double-buffered logits + s_rows tiles), capped by the requested block_rows.
    item = logits.dtype.itemsize + s_rows.dtype.itemsize
    budget = 40 << 20                                            # headroom on v7x (64 MiB VMEM)
    tm_cap = max(8, (budget // (2 * c_pad * item)) // 8 * 8)
    tm = min(_round_up(B, 8), _round_up(block_rows, 8), tm_cap)

    n_cores = 2                                                  # megacore split (v7x); harmless on 1-TC chips
    b_pad = _round_up(B, n_cores * tm)
    tiles_per_core = b_pad // (n_cores * tm)

    if b_pad != B:
        logits = jnp.pad(logits, ((0, b_pad - B), (0, 0)))
        s_rows = jnp.pad(s_rows, ((0, b_pad - B), (0, 0)))
        targets_i = jnp.pad(targets_i, (0, b_pad - B))
    targets2d = targets_i.reshape(b_pad, 1)

    kernel = functools.partial(_seesaw_kernel, tm=tm, b_true=B,
                               needs_mask=(b_pad != B), unit_diag=unit_diag)

    row_map = lambda c, i: (c * tiles_per_core + i, 0)

    in_bytes = tm * c_pad * item + tm * 4
    vmem_limit = int(min(max(2 * in_bytes + (4 << 20), 32 << 20), 56 << 20))

    out = pl.pallas_call(
        kernel,
        out_shape=jax.ShapeDtypeStruct((n_cores, 8, 128), jnp.float32),
        grid_spec=pltpu.PrefetchScalarGridSpec(
            num_scalar_prefetch=0,
            grid=(n_cores, tiles_per_core),
            in_specs=[
                pl.BlockSpec((tm, c_pad), row_map),              # logits tile
                pl.BlockSpec((tm, 1), row_map),                  # targets column
                pl.BlockSpec((tm, c_pad), row_map),              # gathered s rows
            ],
            out_specs=pl.BlockSpec((1, 8, 128), lambda c, i: (c, 0, 0)),
            scratch_shapes=[
                pltpu.VMEM((1, 1), jnp.float32),                 # per-core loss accumulator
            ],
        ),
        compiler_params=pltpu.CompilerParams(
            dimension_semantics=("parallel", "arbitrary"),
            vmem_limit_bytes=vmem_limit,
        ),
    )(logits, targets2d, s_rows)

    return jnp.sum(out[:, 0, 0]) / jnp.float32(B)


def build_seesaw_s(class_counts, p=0.8):
    """Deterministic construction of the seesaw `s` matrix (plain-JAX glue,
    mirrors SeesawLossWithLogits.__init__); diag(s) == 1 by construction."""
    cc = class_counts.astype(jnp.float32)
    conditions = cc[:, None] > cc[None, :]
    trues = (cc[None, :] / cc[:, None]) ** p
    falses = jnp.ones((cc.shape[0], cc.shape[0]), jnp.float32)
    return jnp.where(conditions, trues, falses)


def seesaw_loss_reference(logits, targets, s, num_labels):
    """Pure-JAX reference mirroring the PyTorch forward, for correctness check."""
    t = jax.nn.one_hot(targets, num_labels, dtype=jnp.float32)
    m = logits.max(axis=-1)
    logits = logits - m[:, None]
    num = jnp.exp(logits)
    den = ((1 - t)[:, None, :] * s[None, :, :] * jnp.exp(logits)[:, None, :]
           ).sum(axis=-1) + jnp.exp(logits)
    sigma = num / (den + EPS)
    loss = (-t * jnp.log(sigma + EPS)).sum(-1)
    return loss.mean()


if __name__ == "__main__":
    B, C = 24, 16
    P = 0.8

    key = jax.random.PRNGKey(0)
    k_logits, k_targets, k_counts = jax.random.split(key, 3)

    logits = jax.random.normal(k_logits, (B, C), dtype=jnp.float32)
    targets = jax.random.randint(k_targets, (B,), 0, C, dtype=jnp.int32)
    class_counts = jax.random.randint(k_counts, (C,), 1, 1000,
                                      dtype=jnp.int32).astype(jnp.float32)

    s = build_seesaw_s(class_counts, p=P)

    # small block_rows so the demo exercises a multi-step grid (2 cores x 2 tiles)
    loss = seesaw_loss_with_logits(logits, targets, s, block_rows=8)
    loss = jax.block_until_ready(loss)

    ref = seesaw_loss_reference(logits, targets, s, C)
    assert jnp.allclose(loss, ref, atol=1e-5, rtol=1e-5), (loss, ref)

    print("KERNEL_OK")
</pallas_src>

<mosaic_0001>
module attributes {stable_mosaic.version = 11 : i64} {
  func.func @_seesaw_kernel(%arg0: i32, %arg1: i32, %arg2: memref<8x128xf32, #tpu.memory_space<vmem>>, %arg3: memref<8x1xi32, #tpu.memory_space<vmem>>, %arg4: memref<8x128xf32, #tpu.memory_space<vmem>>, %arg5: memref<1x8x128xf32, #tpu.memory_space<vmem>>, %arg6: memref<1x1xf32, #tpu.memory_space<vmem>>) attributes {dimension_semantics = [#tpu.dimension_semantics<parallel>, #tpu.dimension_semantics<arbitrary>], iteration_bounds = array<i64: 2, 2>, scalar_prefetch = 0 : i64, scratch_operands = 1 : i64, tpu.core_type = #tpu.core_type<tc>, window_params = [{transform_indices = @transform_0, window_bounds = array<i64: 8, 128>}, {transform_indices = @transform_1, window_bounds = array<i64: 8, 1>}, {transform_indices = @transform_2, window_bounds = array<i64: 8, 128>}, {transform_indices = @transform_3, window_bounds = array<i64: 1, 8, 128>}]} {
    %c0_i32 = arith.constant 0 : i32
    %0 = arith.cmpi eq, %arg1, %c0_i32 : i32
    %1 = arith.extui %0 : i1 to i32
    %c0_i32_0 = arith.constant 0 : i32
    %2 = arith.cmpi ne, %1, %c0_i32_0 : i32
    scf.if %2 {
      %cst_18 = arith.constant 0.000000e+00 : f32
      %48 = vector.broadcast %cst_18 : f32 to vector<1x1xf32>
      %c0_19 = arith.constant 0 : index
      %c0_20 = arith.constant 0 : index
      %49 = vector.load %arg6[%c0_19, %c0_20] : memref<1x1xf32, #tpu.memory_space<vmem>>, vector<1x1xf32>
      tpu.vector_store %arg6[%c0_19, %c0_20], %48 {strides = array<i32>} : memref<1x1xf32, #tpu.memory_space<vmem>>, vector<1x1xf32>,
    } else {
    }
    %c0 = arith.constant 0 : index
    %c0_1 = arith.constant 0 : index
    %3 = vector.load %arg2[%c0, %c0_1] : memref<8x128xf32, #tpu.memory_space<vmem>>, vector<8x128xf32>
    %c0_2 = arith.constant 0 : index
    %c0_3 = arith.constant 0 : index
    %4 = vector.load %arg4[%c0_2, %c0_3] : memref<8x128xf32, #tpu.memory_space<vmem>>, vector<8x128xf32>
    %c0_4 = arith.constant 0 : index
    %c0_5 = arith.constant 0 : index
    %5 = vector.load %arg3[%c0_4, %c0_5] : memref<8x1xi32, #tpu.memory_space<vmem>>, vector<8x1xi32>
    %6 = tpu.iota {dimensions = array<i32: 1>} : vector<8x128xi32>
    %7 = vector.broadcast %5 : vector<8x1xi32> to vector<8x128xi32>
    %8 = arith.cmpi eq, %6, %7 : vector<8x128xi32>
    %9 = arith.extui %8 : vector<8x128xi1> to vector<8x128xi32>
    %10 = arith.sitofp %9 : vector<8x128xi32> to vector<8x128xf32>
    %cst = arith.constant dense<0xFF800000> : vector<8xf32>
    %11 = vector.multi_reduction <maximumf>, %3, %cst [1] : vector<8x128xf32> to vector<8xf32>
    %12 = vector.shape_cast %11 : vector<8xf32> to vector<8x1xf32>
    %13 = vector.broadcast %12 : vector<8x1xf32> to vector<8x128xf32>
    %14 = arith.subf %3, %13 : vector<8x128xf32>
    %15 = math.exp %14 : vector<8x128xf32>
    %16 = arith.mulf %10, %15 : vector<8x128xf32>
    %cst_6 = arith.constant dense<0.000000e+00> : vector<8xf32>
    %17 = vector.multi_reduction <add>, %16, %cst_6 [1] : vector<8x128xf32> to vector<8xf32>
    %18 = vector.shape_cast %17 : vector<8xf32> to vector<8x1xf32>
    %19 = arith.mulf %4, %15 : vector<8x128xf32>
    %cst_7 = arith.constant dense<0.000000e+00> : vector<8xf32>
    %20 = vector.multi_reduction <add>, %19, %cst_7 [1] : vector<8x128xf32> to vector<8xf32>
    %21 = vector.shape_cast %20 : vector<8xf32> to vector<8x1xf32>
    %cst_8 = arith.constant 9.99999997E-7 : f32
    %22 = vector.broadcast %cst_8 : f32 to vector<8x1xf32>
    %23 = arith.addf %21, %22 : vector<8x1xf32>
    %24 = arith.divf %18, %23 : vector<8x1xf32>
    %cst_9 = arith.constant 9.99999997E-7 : f32
    %25 = vector.broadcast %cst_9 : f32 to vector<8x1xf32>
    %26 = arith.addf %24, %25 : vector<8x1xf32>
    %27 = math.log %26 : vector<8x1xf32>
    %cst_10 = arith.constant 0.000000e+00 : f32
    %28 = vector.broadcast %cst_10 : f32 to vector<8x1xf32>
    %29 = arith.subf %28, %27 : vector<8x1xf32>
    %c2_i32 = arith.constant 2 : i32
    %30 = arith.muli %arg0, %c2_i32 : i32
    %31 = arith.addi %30, %arg1 : i32
    %c8_i32 = arith.constant 8 : i32
    %32 = arith.muli %31, %c8_i32 : i32
    %33 = tpu.iota {dimensions = array<i32: 0>} : vector<8x1xi32>
    %34 = vector.broadcast %32 : i32 to vector<8x1xi32>
    %35 = arith.addi %34, %33 : vector<8x1xi32>
    %c24_i32 = arith.constant 24 : i32
    %36 = vector.broadcast %c24_i32 : i32 to vector<8x1xi32>
    %37 = arith.cmpi slt, %35, %36 : vector<8x1xi32>
    %cst_11 = arith.constant 0.000000e+00 : f32
    %38 = vector.broadcast %cst_11 : f32 to vector<8x1xf32>
    %39 = arith.select %37, %29, %38 : vector<8x1xi1>, vector<8x1xf32>
    %c0_12 = arith.constant 0 : index
    %c0_13 = arith.constant 0 : index
    %40 = vector.load %arg6[%c0_12, %c0_13] : memref<1x1xf32, #tpu.memory_space<vmem>>, vector<1x1xf32>
    %cst_14 = arith.constant dense<0.000000e+00> : vector<1xf32>
    %41 = vector.multi_reduction <add>, %39, %cst_14 [0] : vector<8x1xf32> to vector<1xf32>
    %42 = vector.shape_cast %41 : vector<1xf32> to vector<1x1xf32>
    %43 = arith.addf %40, %42 : vector<1x1xf32>
    %c0_15 = arith.constant 0 : index
    %c0_16 = arith.constant 0 : index
    %44 = vector.load %arg6[%c0_15, %c0_16] : memref<1x1xf32, #tpu.memory_space<vmem>>, vector<1x1xf32>
    tpu.vector_store %arg6[%c0_15, %c0_16], %43 {strides = array<i32>} : memref<1x1xf32, #tpu.memory_space<vmem>>, vector<1x1xf32>,
    %c1_i32 = arith.constant 1 : i32
    %45 = arith.cmpi eq, %arg1, %c1_i32 : i32
    %46 = arith.extui %45 : i1 to i32
    %c0_i32_17 = arith.constant 0 : i32
    %47 = arith.cmpi ne, %46, %c0_i32_17 : i32
    scf.if %47 {
      %c0_18 = arith.constant 0 : index
      %c0_19 = arith.constant 0 : index
      %48 = vector.load %arg6[%c0_18, %c0_19] : memref<1x1xf32, #tpu.memory_space<vmem>>, vector<1x1xf32>
      %49 = vector.shape_cast %48 : vector<1x1xf32> to vector<1x1xf32>
      %50 = vector.broadcast %49 : vector<1x1xf32> to vector<8x128xf32>
      %51 = vector.shape_cast %50 : vector<8x128xf32> to vector<1x8x128xf32>
      %c0_20 = arith.constant 0 : index
      %c0_21 = arith.constant 0 : index
      %c0_22 = arith.constant 0 : index
      %52 = vector.load %arg5[%c0_20, %c0_21, %c0_22] : memref<1x8x128xf32, #tpu.memory_space<vmem>>, vector<1x8x128xf32>
      tpu.vector_store %arg5[%c0_20, %c0_21, %c0_22], %51 {strides = array<i32>} : memref<1x8x128xf32, #tpu.memory_space<vmem>>, vector<1x8x128xf32>,
    } else {
    }
    return
  }
  func.func @transform_0(%arg0: i32, %arg1: i32) -> (i32, i32) {
    %c2_i32 = arith.constant 2 : i32
    %0 = arith.muli %arg0, %c2_i32 : i32
    %1 = arith.addi %0, %arg1 : i32
    %c0_i32 = arith.constant 0 : i32
    %c0_i32_0 = arith.constant 0 : i32
    return %1, %c0_i32 : i32, i32
  }
  func.func @transform_1(%arg0: i32, %arg1: i32) -> (i32, i32) {
    %c2_i32 = arith.constant 2 : i32
    %0 = arith.muli %arg0, %c2_i32 : i32
    %1 = arith.addi %0, %arg1 : i32
    %c0_i32 = arith.constant 0 : i32
    %c0_i32_0 = arith.constant 0 : i32
    return %1, %c0_i32 : i32, i32
  }
  func.func @transform_2(%arg0: i32, %arg1: i32) -> (i32, i32) {
    %c2_i32 = arith.constant 2 : i32
    %0 = arith.muli %arg0, %c2_i32 : i32
    %1 = arith.addi %0, %arg1 : i32
    %c0_i32 = arith.constant 0 : i32
    %c0_i32_0 = arith.constant 0 : i32
    return %1, %c0_i32 : i32, i32
  }
  func.func @transform_3(%arg0: i32, %arg1: i32) -> (i32, i32, i32) {
    %c0_i32 = arith.constant 0 : i32
    %c0_i32_0 = arith.constant 0 : i32
    %c0_i32_1 = arith.constant 0 : i32
    return %arg0, %c0_i32, %c0_i32_0 : i32, i32, i32
  }
}

</mosaic_0001>

<llo_original>
// kernel: tpu_custom_call.1
$region0: #{tpu_custom_call.1}
  #allocation0 [shape = 'u32[]', space=smem, size = 0x4, offset = 0x4, fixed_abs, tag = 'smem constant byte address 0x4 - core index']
  #allocation1 [shape = 'u32[144,128]{1,0:T(1,128)}', space=vmem, size = 0x12000, scoped, tag = 'internal scratch']
  #allocation2 [shape = 'f32[1,1]{1,0:T(1,128)}', space=vmem, size = 0x200, scoped, tag = 'scratch operand']
  %s0 = inlined_call_operand.vmem [shape: f32[32,128], index: 0, kind: input, shape index: {}]
  %s1 = inlined_call_operand.vmem [shape: s32[32,1], index: 1, kind: input, shape index: {}]
  %s2 = inlined_call_operand.hbm [shape: f32[32,128], index: 2, kind: input, shape index: {}]
  %s3 = inlined_call_operand.hbm [shape: f32[2,8,128], index: 3, kind: output, shape index: {}]
  %s4 = sld [smem:[#allocation0]]
  $region57: #{tpu_custom_call.1} parent=0
    _
  %s6 = ssub.s32 1, %s4
  %s7 = scalar_select 0, %s6, %s4
  $region1: #{tpu_custom_call.1} parent=0
    #allocation3 [shape = 'u8[8192]{0}', space=vmem, size = 0x2000, scoped, tag = 'input window, operand 2']
    #allocation4 [shape = 's32[2]{0}', space=sflag, size = 0x8, scoped, tag = 'scoped memory for tpu_custom_call.1']
    #allocation5 [shape = 's32[2]{0}', space=sflag, size = 0x8, scoped, tag = 'scoped memory for tpu_custom_call.1']
    #allocation6 [shape = 'u8[8192]{0}', space=vmem, size = 0x2000, scoped, tag = 'output window, operand 0']
    %8 = vsyncpa [#allocation4], 0
    %s9 = scalar_lea.sflag [#allocation4], 1
    %10 = vsyncpa %s9, 0
    %11 = vsyncpa [#allocation5], 0
    %s12 = scalar_lea.sflag [#allocation5], 1
    %13 = vsyncpa %s12, 0
    loop: start=0, step=1, limit=6
    $region2: #{tpu_custom_call.1} parent=1 // loop_pre_header
      _
    $region3: #{tpu_custom_call.1} parent=1 // loop_header
      %s15 = sphi 0, %s19
      %p16 = scmp.ge.s32.totalorder %s15, 6
      %s22 = sphi 0, %s34
      %s23 = sphi 0, %s30
      %s24 = sphi 0, %s22
      %s25 = sphi 0, %s23
      %s26 = sphi 0, %s24
      %s27 = sphi 0, %s25
      %s41 = sphi 0, %s43
      %s44 = sphi 0, %s41
      %s45 = sphi 0, %s44
      %s61 = sphi 0, %s45
      %s71 = sphi 0, %s73
      %s74 = sphi 0, %s71
      %s75 = sphi 0, %s74
      %s91 = sphi 0, %s75
      %s101 = sphi 0, %s103
      %s104 = sphi 0, %s101
      %s105 = sphi 0, %s104
      %s121 = sphi 0, %s105
      %s127 = sphi 0, %s129
      %s130 = sphi 0, %s127
      %s131 = sphi 0, %s130
      %s147 = sphi 0, %s131
    $region4: #{tpu_custom_call.1} parent=1 // loop_header_branch
      %18 = sbr.rel (%p16) target = $region8
    $region5: #{tpu_custom_call.1} parent=1 // loop_body
      %s20 = ssub.s32 %s15, 1
      %s21 = ssub.s32 %s15, 2
      %s28 = sadd.s32 1, %s23
      %p29 = scmp.ge.s32.totalorder %s28, 2
      %s30 = scalar_select %p29, 0, %s28
      %s31 = sadd.s32 1, %s22
      %s32 = scalar_select %p29, %s31, %s22
      %p33 = scmp.ge.s32.totalorder %s32, 2
      %s34 = scalar_select %p33, 0, %s32
      %s35 = smul.u32 %s22, 2
      %s36 = sadd.s32 %s35, %s23
      %s37 = smul.u32 %s34, 2
      %s38 = sadd.s32 %s37, %s30
      %s39 = ssub.s32 %s36, %s38
      %p40 = scmp.eq.s32.totalorder %s39, 0
      %s42 = sadd.s32 %s41, 1
      %s43 = scalar_select %p40, %s41, %s42
      %p46 = pneg %p40
      %p47 = scmp.eq.s32.totalorder %s15, 3
      %p48 = por %p46, %p47
      %p49 = scmp.ne.s32.totalorder %s41, %s44
      %p50 = scmp.eq.s32.totalorder %s15, 0
      %p51 = por %p49, %p50
      %p52 = scmp.ne.s32.totalorder %s41, %s44
      %p53 = scmp.eq.s32.totalorder %s20, 3
      %p54 = por %p52, %p53
      %p55 = scmp.ne.s32.totalorder %s44, %s45
      %p56 = scmp.eq.s32.totalorder %s20, 0
      %p57 = por %p55, %p56
      %p58 = scmp.ne.s32.totalorder %s44, %s45
      %p59 = scmp.eq.s32.totalorder %s21, 3
      %p60 = por %p58, %p59
      %p62 = scmp.ne.s32.totalorder %s45, %s61
      %p63 = scmp.eq.s32.totalorder %s21, 0
      %p64 = por %p62, %p63
      %s65 = smul.u32 %s22, 2
      %s66 = sadd.s32 %s65, %s23
      %s67 = smul.u32 %s34, 2
      %s68 = sadd.s32 %s67, %s30
      %s69 = ssub.s32 %s66, %s68
      %p70 = scmp.eq.s32.totalorder %s69, 0
      %s72 = sadd.s32 %s71, 1
      %s73 = scalar_select %p70, %s71, %s72
      %p76 = pneg %p70
      %p77 = scmp.eq.s32.totalorder %s15, 3
      %p78 = por %p76, %p77
      %p79 = scmp.ne.s32.totalorder %s71, %s74
      %p80 = scmp.eq.s32.totalorder %s15, 0
      %p81 = por %p79, %p80
      %p82 = scmp.ne.s32.totalorder %s71, %s74
      %p83 = scmp.eq.s32.totalorder %s20, 3
      %p84 = por %p82, %p83
      %p85 = scmp.ne.s32.totalorder %s74, %s75
      %p86 = scmp.eq.s32.totalorder %s20, 0
      %p87 = por %p85, %p86
      %p88 = scmp.ne.s32.totalorder %s74, %s75
      %p89 = scmp.eq.s32.totalorder %s21, 3
      %p90 = por %p88, %p89
      %p92 = scmp.ne.s32.totalorder %s75, %s91
      %p93 = scmp.eq.s32.totalorder %s21, 0
      %p94 = por %p92, %p93
      %s95 = smul.u32 %s22, 2
      %s96 = sadd.s32 %s95, %s23
      %s97 = smul.u32 %s34, 2
      %s98 = sadd.s32 %s97, %s30
      %s99 = ssub.s32 %s96, %s98
      %p100 = scmp.eq.s32.totalorder %s99, 0
      %s102 = sadd.s32 %s101, 1
      %s103 = scalar_select %p100, %s101, %s102
      %p106 = pneg %p100
      %p107 = scmp.eq.s32.totalorder %s15, 3
      %p108 = por %p106, %p107
      %p109 = scmp.ne.s32.totalorder %s101, %s104
      %p110 = scmp.eq.s32.totalorder %s15, 0
      %p111 = por %p109, %p110
      %p112 = scmp.ne.s32.totalorder %s101, %s104
      %p113 = scmp.eq.s32.totalorder %s20, 3
      %p114 = por %p112, %p113
      %p115 = scmp.ne.s32.totalorder %s104, %s105
      %p116 = scmp.eq.s32.totalorder %s20, 0
      %p117 = por %p115, %p116
      %p118 = scmp.ne.s32.totalorder %s104, %s105
      %p119 = scmp.eq.s32.totalorder %s21, 3
      %p120 = por %p118, %p119
      %p122 = scmp.ne.s32.totalorder %s105, %s121
      %p123 = scmp.eq.s32.totalorder %s21, 0
      %p124 = por %p122, %p123
      %s125 = ssub.s32 %s22, %s34
      %p126 = scmp.eq.s32.totalorder %s125, 0
      %s128 = sadd.s32 %s127, 1
      %s129 = scalar_select %p126, %s127, %s128
      %p132 = pneg %p126
      %p133 = scmp.eq.s32.totalorder %s15, 3
      %p134 = por %p132, %p133
      %p135 = scmp.ne.s32.totalorder %s127, %s130
      %p136 = scmp.eq.s32.totalorder %s15, 0
      %p137 = por %p135, %p136
      %p138 = scmp.ne.s32.totalorder %s127, %s130
      %p139 = scmp.eq.s32.totalorder %s20, 3
      %p140 = por %p138, %p139
      %p141 = scmp.ne.s32.totalorder %s130, %s131
      %p142 = scmp.eq.s32.totalorder %s20, 0
      %p143 = por %p141, %p142
      %p144 = scmp.ne.s32.totalorder %s130, %s131
      %p145 = scmp.eq.s32.totalorder %s21, 3
      %p146 = por %p144, %p145
      %p148 = scmp.ne.s32.totalorder %s131, %s147
      %p149 = scmp.eq.s32.totalorder %s21, 0
      %p150 = por %p148, %p149
      %p151 = scmp.le.s32.totalorder 1, %s15
      %p152 = scmp.lt.s32.totalorder %s15, 5
      %p153 = pnand %p151, %p152
      %p154 = pneg %p153
      // Predicated region
      $region9: #{tpu_custom_call.1} parent=5 // pred_check
        _
      $region10: #{tpu_custom_call.1} parent=5 // pred_check_branch
        %156 = sbr.rel (%p153) target = $region12
      $region11: #{tpu_custom_call.1} parent=5 // pred_region
        %s157 = ssub.s32 %s15, 1
      $region12: #{tpu_custom_call.1} parent=5 // pred_fallthru
        _
      %p158 = scmp.lt.s32.totalorder %s15, 4
      // Predicated region
      $region13: #{tpu_custom_call.1} parent=5 // pred_check
        %p159 = pneg %p158
      $region14: #{tpu_custom_call.1} parent=5 // pred_check_branch
        %161 = sbr.rel (%p159) target = $region16
      $region15: #{tpu_custom_call.1} parent=5 // pred_region
        // Predicated region
        $region17: #{tpu_custom_call.1} parent=15 // pred_check
          %p162 = pneg %p51
        $region18: #{tpu_custom_call.1} parent=15 // pred_check_branch
          %164 = sbr.rel (%p162) target = $region20
        $region19: #{tpu_custom_call.1} parent=15 // pred_region
          %s165 = smul.u32 %s22, 2
          %s166 = sadd.s32 %s165, %s23
          %p167 = scmp.lt.s32.totalorder %s166, 3
          %s168 = scalar_select %p167, %s166, 3
          %s169 = smul.addr %s168, 8
          %s170 = scalar_lea.vmem %s0, %s169
          %s171 = smul.u32 %s22, 2
          %s172 = sadd.s32 %s171, %s23
        $region20: #{tpu_custom_call.1} parent=15 // pred_fallthru
          _
        // Predicated region
        $region21: #{tpu_custom_call.1} parent=15 // pred_check
          %p173 = pneg %p81
        $region22: #{tpu_custom_call.1} parent=15 // pred_check_branch
          %175 = sbr.rel (%p173) target = $region24
        $region23: #{tpu_custom_call.1} parent=15 // pred_region
          %s176 = smul.u32 %s22, 2
          %s177 = sadd.s32 %s176, %s23
          %p178 = scmp.lt.s32.totalorder %s177, 3
          %s179 = scalar_select %p178, %s177, 3
          %s180 = smul.addr %s179, 8
          %s181 = scalar_lea.vmem %s1, %s180
          %s182 = smul.u32 %s22, 2
          %s183 = sadd.s32 %s182, %s23
        $region24: #{tpu_custom_call.1} parent=15 // pred_fallthru
          _
        // Predicated region
        $region25: #{tpu_custom_call.1} parent=15 // pred_check
          %p184 = pneg %p111
        $region26: #{tpu_custom_call.1} parent=15 // pred_check_branch
          %186 = sbr.rel (%p184) target = $region28
        $region27: #{tpu_custom_call.1} parent=15 // pred_region
          %s187 = sand.u32 %s101, 1
          %s188 = scalar_lea.sflag [#allocation4], %s187
          %s189 = sand.u32 %s101, 1
          %s190 = smul.addr %s189, 8
          %s191 = scalar_lea.vmem [#allocation3], %s190
          %s192 = smul.u32 %s22, 2
          %s193 = sadd.s32 %s192, %s23
          %s195 = ssub.s32 128, 128
          %196 = vsyncadd %s188, %s195
          %s197 = smul.addr %s193, 128
          %s198 = scalar_lea.hbm %s2, %s197
          %s200 = sshll.u32 %s191, 4
          %s201 = int_to_ptr.vmem [resolvable:$true] %s200
          %203 = dma.hbm_to_vmem [thread:$0]  %s198, 128, %s201, %s188
        $region28: #{tpu_custom_call.1} parent=15 // pred_fallthru
          _
      $region16: #{tpu_custom_call.1} parent=5 // pred_fallthru
        _
      %p204 = scmp.le.s32.totalorder 1, %s15
      %p205 = scmp.lt.s32.totalorder %s15, 5
      %p206 = pnand %p204, %p205
      %p207 = pneg %p206
      // Predicated region
      $region29: #{tpu_custom_call.1} parent=5 // pred_check
        _
      $region30: #{tpu_custom_call.1} parent=5 // pred_check_branch
        %209 = sbr.rel (%p206) target = $region32
      $region31: #{tpu_custom_call.1} parent=5 // pred_region
        %s210 = ssub.s32 %s15, 1
        %s211 = sand.u32 %s104, 1
        %s212 = scalar_lea.sflag [#allocation4], %s211
        %s213 = sand.u32 %s104, 1
        %s214 = smul.addr %s213, 8
        %s215 = scalar_lea.vmem [#allocation3], %s214
        // Predicated region
        $region33: #{tpu_custom_call.1} parent=31 // pred_check
          %p216 = pneg %p117
        $region34: #{tpu_custom_call.1} parent=31 // pred_check_branch
          %218 = sbr.rel (%p216) target = $region36
        $region35: #{tpu_custom_call.1} parent=31 // pred_region
          %219 = dma.done %s212, 128
        $region36: #{tpu_custom_call.1} parent=31 // pred_fallthru
          _
        %s220 = smul.u32 %s24, 2
        %s221 = sadd.s32 %s220, %s25
        %p222 = scmp.lt.s32.totalorder %s221, 3
        %s223 = scalar_select %p222, %s221, 3
        %s224 = smul.addr %s223, 8
        %s225 = scalar_lea.vmem %s0, %s224
        %p226 = pneg %p57
        %p227 = pneg %p54
        %s228 = smul.u32 %s24, 2
        %s229 = sadd.s32 %s228, %s25
        %p230 = scmp.lt.s32.totalorder %s229, 3
        %s231 = scalar_select %p230, %s229, 3
        %s232 = smul.addr %s231, 8
        %s233 = scalar_lea.vmem %s1, %s232
        %p234 = pneg %p87
        %p235 = pneg %p84
        %s236 = sand.u32 %s104, 1
        %s237 = scalar_lea.sflag [#allocation4], %s236
        %s238 = sand.u32 %s104, 1
        %s239 = smul.addr %s238, 8
        %s240 = scalar_lea.vmem [#allocation3], %s239
        %p241 = pneg %p117
        %p242 = pneg %p114
        %p243 = pneg %p143
        %p244 = pneg %p140
        %s245 = sand.u32 %s130, 1
        %s246 = scalar_lea.sflag [#allocation5], %s245
        %s247 = sand.u32 %s130, 1
        %s248 = smul.addr %s247, 8
        %s249 = scalar_lea.vmem [#allocation6], %s248
        %s250 = smul.u32 %s24, 2
        %s251 = sadd.s32 %s250, %s25
        %p252 = scmp.lt.s32.totalorder %s251, 3
        %s253 = scalar_select %p252, %s251, 3
        %s254 = smul.addr %s253, 8
        %s255 = scalar_lea.vmem %s0, %s254
        %s256 = smul.u32 %s24, 2
        %s257 = sadd.s32 %s256, %s25
        %s258 = smul.u32 %s24, 2
        %s259 = sadd.s32 %s258, %s25
        %p260 = scmp.lt.s32.totalorder %s259, 3
        %s261 = scalar_select %p260, %s259, 3
        %s262 = smul.addr %s261, 8
        %s263 = scalar_lea.vmem %s1, %s262
        %s264 = smul.u32 %s24, 2
        %s265 = sadd.s32 %s264, %s25
        %s266 = smul.u32 %s24, 2
        %s267 = sadd.s32 %s266, %s25
        %p268 = scmp.eq.s32.totalorder %s25, 0
        // Predicated region
        $region37: #{tpu_custom_call.1} parent=31 // pred_check
          %p269 = pneg %p268
        $region38: #{tpu_custom_call.1} parent=31 // pred_check_branch
          %271 = sbr.rel (%p269) target = $region40
        $region39: #{tpu_custom_call.1} parent=31 // pred_region
          %vm272 = vcmask 0
          %273 = vst.msk [vmem:[#allocation2] sm:$0x1] %vm272, 0.0
        $region40: #{tpu_custom_call.1} parent=31 // pred_fallthru
          _
        %v274 = vld [vmem:[%s255] sm:$0xff]
        %v275 = vld [vmem:[%s215] sm:$0xff]
        %v276 = vld [vmem:[%s263] sm:$0xff]
        %v277 = vlaneseq
        %v278 = vand.u32 %v277, 127
        %279 = vset.pattern.permute.xlu0 0
        %280 = vperm.xlu0 %279, %v276
        %v281 = vpop.permute.xlu0 %280
        %vm282 = vcmp.eq.s32.totalorder %v278, %v281
        %v283 = vsel %vm282, 1, 0
        %v284 = vcvt.s32.f32 %v283
        %285 = vmax.xlane.f32.xlu0 %v274
        %v286 = vpop.xlane.xlu0 %285
        %v287 = vsub.f32 %v274, %v286
        %v288 = vmul.f32 %v287, 1.442695
        %v289 = vpow.pop %v288
        %v290 = vmul.f32 %v284, %v289
        %291 = vadd.xlane.f32.xlu0 %v290
        %v292 = vpop.xlane.xlu0 %291
        %v293 = vmul.f32 %v275, %v289
        %294 = vadd.xlane.f32.xlu0 %v293
        %v295 = vpop.xlane.xlu0 %294
        %v296 = vadd.f32 %v295, 1e-06
        %v297 = vrcp.pop %v296
        %v298 = vmul.f32 %v292, %v297
        %v299 = vadd.f32 %v298, 1e-06
        %v300 = vlog2.pop %v299
        %v301 = vmul.f32 %v300, 0.6931472
        %v302 = vsub.f32 0.0, %v301
        %s303 = smul.u32 %s24, 2
        %s304 = sadd.s32 %s303, %s25
        %s305 = smul.u32 %s304, 8
        %v306 = vlaneseq
        %v307 = vshrl.u32 %v306, 7
        %v308 = vstv %s305
        %v309 = vadd.s32 %v308, %v307
        %vm310 = vcmp.lt.s32.totalorder %v309, 24
        %v311 = vsel %vm310, %v302, 0.0
        %v312 = vld [vmem:[#allocation2] sm:$0x1]
        %v313 = vrot.slane %v311, 4
        %v314 = vadd.f32 %v311, %v313
        %v315 = vrot.slane %v314, 2
        %v316 = vadd.f32 %v314, %v315
        %v317 = vrot.slane %v316, 1
        %v318 = vadd.f32 %v316, %v317
        %v319 = vadd.f32 %v312, %v318
        %vm320 = vcmask 0
        %321 = vst.msk [vmem:[#allocation2] sm:$0x1] %vm320, %v319
        %p322 = scmp.eq.s32.totalorder %s25, 1
        // Predicated region
        $region41: #{tpu_custom_call.1} parent=31 // pred_check
          %p323 = pneg %p322
        $region42: #{tpu_custom_call.1} parent=31 // pred_check_branch
          %325 = sbr.rel (%p323) target = $region44
        $region43: #{tpu_custom_call.1} parent=31 // pred_region
          %v326 = vld [vmem:[#allocation2] sm:$0x1]
          %v328 = vlaneseq
          %v329 = vshrl.u32 %v328, 7
          %v330 = vsub.s32 0, %v329
          %v331 = vrot.slane %v326, %v330
          %332 = vset.pattern.permute.xlu0 0
          %333 = vperm.xlu0 %332, %v331
          %v334 = vpop.permute.xlu0 %333
          %336 = vst [vmem:[%s249] sm:$0xff] %v334
        $region44: #{tpu_custom_call.1} parent=31 // pred_fallthru
          _
        %s337 = sand.u32 %s130, 1
        %s338 = scalar_lea.sflag [#allocation5], %s337
        %s339 = sand.u32 %s130, 1
        %s340 = smul.addr %s339, 8
        %s341 = scalar_lea.vmem [#allocation6], %s340
        // Predicated region
        $region45: #{tpu_custom_call.1} parent=31 // pred_check
          %p342 = pneg %p140
        $region46: #{tpu_custom_call.1} parent=31 // pred_check_branch
          %344 = sbr.rel (%p342) target = $region48
        $region47: #{tpu_custom_call.1} parent=31 // pred_region
          %s346 = ssub.s32 128, 128
          %347 = vsyncadd %s338, %s346
          %s348 = smul.addr %s24, 128
          %s349 = scalar_lea.hbm %s3, %s348
          %s351 = sshll.u32 %s341, 4
          %s352 = int_to_ptr.vmem [resolvable:$true] %s351
          %354 = dma.vmem_to_hbm [thread:$0]  %s352, 128, %s349, %s338
        $region48: #{tpu_custom_call.1} parent=31 // pred_fallthru
          _
      $region32: #{tpu_custom_call.1} parent=5 // pred_fallthru
        _
      %p355 = scmp.le.s32.totalorder 2, %s15
      // Predicated region
      $region49: #{tpu_custom_call.1} parent=5 // pred_check
        %p356 = pneg %p355
      $region50: #{tpu_custom_call.1} parent=5 // pred_check_branch
        %358 = sbr.rel (%p356) target = $region52
      $region51: #{tpu_custom_call.1} parent=5 // pred_region
        %s359 = ssub.s32 %s15, 2
        // Predicated region
        $region53: #{tpu_custom_call.1} parent=51 // pred_check
          %p360 = pneg %p146
        $region54: #{tpu_custom_call.1} parent=51 // pred_check_branch
          %362 = sbr.rel (%p360) target = $region56
        $region55: #{tpu_custom_call.1} parent=51 // pred_region
          %s363 = sand.u32 %s131, 1
          %s364 = scalar_lea.sflag [#allocation5], %s363
          %s365 = sand.u32 %s131, 1
          %s366 = smul.addr %s365, 8
          %s367 = scalar_lea.vmem [#allocation6], %s366
          %368 = dma.done %s364, 128
        $region56: #{tpu_custom_call.1} parent=51 // pred_fallthru
          _
      $region52: #{tpu_custom_call.1} parent=5 // pred_fallthru
        _
    $region6: #{tpu_custom_call.1} parent=1 // loop_footer
      %s19 = sadd.s32 1, %s15
    $region7: #{tpu_custom_call.1} parent=1 // loop_footer_branch
      %14 = sbr.rel target = $region3
    $region8: #{tpu_custom_call.1} parent=1 // loop_exit
      _
    %369 = vsyncpa [#allocation4], 1
    %s370 = scalar_lea.sflag [#allocation4], 1
    %371 = vsyncpa %s370, 1
    %372 = vsyncpa [#allocation5], 1
    %s373 = scalar_lea.sflag [#allocation5], 1
    %374 = vsyncpa %s373, 1

</llo_original>
